<compile_context>
chip_gen: v7x
topology: tpu7x:2x2x1
jax: 0.10.0
libtpu: 0.0.40
codegen_flags: <defaults>
</compile_context>

<pallas_src>
import jax
import jax.numpy as jnp
from jax.experimental import pallas as pl
from jax.experimental.pallas import tpu as pltpu

EPS = 1e-5


def _round_up(x, m):
    return ((x + m - 1) // m) * m


def _pad2(a, rows, cols):
    return jnp.pad(a, ((0, rows - a.shape[0]), (0, cols - a.shape[1])))


def _vmem_capacity_bytes():
    """Generation-aware VMEM capacity (v5e/v6e: 128 MiB, v7x: 64 MiB)."""
    try:
        cap = getattr(pltpu.get_tpu_info(), "vmem_capacity_bytes", None)
        if cap:
            return int(cap)
    except Exception:
        pass
    return 64 * 2**20          # conservative (v7x-sized) fallback


def _choose_tk(d_pad, feat_p, b_pad, vmem_cap):
    """Pick the K tile: collapse to one grid step when everything fits."""
    full_bytes = (d_pad * feat_p + b_pad * d_pad) * 2        # bf16 W1 + x slabs
    if 2 * full_bytes <= vmem_cap // 3:                      # x2 for pipeline buffers
        return d_pad                                         # nk == 1
    tk_target = 1024 if vmem_cap >= 96 * 2**20 else 512      # big tiles on 128 MiB parts
    tk = min(tk_target, d_pad)
    while d_pad % tk:                                        # tk must divide d_pad;
        tk -= 128                                            # 128 always does
    return tk


def netwrapper_kernel(nb_ref,                                # scalar prefetch (SMEM)
                      x_ref, w1_ref, b1_ref,                 # K-streamed inputs + bias
                      bp1_ref, gamma_ref, beta_ref, bp2_ref, # small row vectors
                      wp1_hbm, wp2_hbm,                      # raw HBM refs (pl.ANY)
                      proj_ref, rep_ref,                     # resident outputs
                      wp1_vmem, wp2_vmem, dma_sem):          # scratch
    k = pl.program_id(0)
    nk = pl.num_programs(0)

    @pl.when(k == 0)
    def _init():
        rep_ref[...] = jnp.zeros_like(rep_ref)
        # Single-buffered projector-weight fetch, overlapped with the K loop.
        pltpu.make_async_copy(wp1_hbm, wp1_vmem, dma_sem.at[0]).start()
        pltpu.make_async_copy(wp2_hbm, wp2_vmem, dma_sem.at[1]).start()

    # Backbone hidden layer, K-tiled: bf16 operands, f32 accumulation into the
    # resident (B_pad, feat_pad) output block.
    rep_ref[...] += jnp.dot(x_ref[...], w1_ref[...],
                            preferred_element_type=jnp.float32)

    @pl.when(k == nk - 1)
    def _finalize():
        rep = jnp.maximum(rep_ref[...] + b1_ref[...], 0.0)   # (B_pad, feat_pad)
        rep_ref[...] = rep

        # Projector: Linear -> BatchNorm1d (train mode) -> ReLU -> Linear.
        pltpu.make_async_copy(wp1_hbm, wp1_vmem, dma_sem.at[0]).wait()
        pltpu.make_async_copy(wp2_hbm, wp2_vmem, dma_sem.at[1]).wait()

        z = jnp.dot(rep.astype(jnp.bfloat16), wp1_vmem[...],
                    preferred_element_type=jnp.float32) + bp1_ref[...]

        # Batch statistics over the REAL batch rows only (batch is padded to a
        # sublane multiple); padded rows/cols are sliced away in the wrapper.
        b_real = nb_ref[0]
        row = jax.lax.broadcasted_iota(jnp.int32, z.shape, 0)
        in_batch = row < b_real
        inv_n = 1.0 / b_real.astype(jnp.float32)
        mean = jnp.sum(jnp.where(in_batch, z, 0.0), axis=0, keepdims=True) * inv_n
        dev = jnp.where(in_batch, z - mean, 0.0)
        var = jnp.sum(dev * dev, axis=0, keepdims=True) * inv_n
        zn = (z - mean) * jax.lax.rsqrt(var + EPS) * gamma_ref[...] + beta_ref[...]
        a = jnp.maximum(zn, 0.0)

        proj_ref[...] = jnp.dot(a.astype(jnp.bfloat16), wp2_vmem[...],
                                preferred_element_type=jnp.float32) + bp2_ref[...]


def prepare_params(params):
    """Pad + cast weights to lane-dense bf16/f32 slabs ONCE (outside hot path).

    Padded feature / hidden / projection columns stay exactly zero downstream
    because their bias, gamma and beta pads are zero (BN input 0 -> zn 0 ->
    relu 0 -> no contribution).  Keep this invariant if params are pre-padded.
    """
    (w1, b1, wp1, bp1, gamma, beta, wp2, bp2) = params
    d_in, feat = w1.shape
    hid = wp1.shape[1]
    proj = wp2.shape[1]
    d_pad = _round_up(d_in, 128)         # lane requirement only (tk-independent)
    feat_p = _round_up(feat, 128)
    hid_p = _round_up(hid, 128)
    proj_p = _round_up(proj, 128)
    return dict(
        dims=(d_in, feat, hid, proj, d_pad, feat_p, hid_p, proj_p),
        w1=_pad2(w1, d_pad, feat_p).astype(jnp.bfloat16),
        b1=_pad2(b1, 1, feat_p).astype(jnp.float32),
        wp1=_pad2(wp1, feat_p, hid_p).astype(jnp.bfloat16),
        bp1=_pad2(bp1, 1, hid_p).astype(jnp.float32),
        gamma=_pad2(gamma, 1, hid_p).astype(jnp.float32),
        beta=_pad2(beta, 1, hid_p).astype(jnp.float32),
        wp2=_pad2(wp2, hid_p, proj_p).astype(jnp.bfloat16),
        bp2=_pad2(bp2, 1, proj_p).astype(jnp.float32),
    )


def netwrapper_forward(x, prepared):
    """x: (B, C, H, W) float32.  Returns (projection, representation)."""
    d_in, feat, hid, proj, d_pad, feat_p, hid_p, proj_p = prepared["dims"]
    B = x.shape[0]
    x_flat = x.reshape(B, -1)                               # glue: Flatten
    assert x_flat.shape[1] == d_in

    b_pad = max(8, _round_up(B, 8))
    vmem_cap = _vmem_capacity_bytes()
    tk = _choose_tk(d_pad, feat_p, b_pad, vmem_cap)
    nk = d_pad // tk

    # Only x is padded / cast in the hot path; zero-padding is value-preserving.
    xp = _pad2(x_flat, b_pad, d_pad).astype(jnp.bfloat16)
    nb = jnp.array([B], dtype=jnp.int32)

    # VMEM budget: double-buffered K tiles, single-buffered projector weights
    # (manual DMA scratch), small row vectors, resident outputs, BN temporaries.
    est = (2 * (b_pad * tk + tk * feat_p) * 2               # bf16 K tiles x2 buffers
           + (feat_p * hid_p + hid_p * proj_p) * 2          # bf16 projector scratch x1
           + 2 * (feat_p + 3 * hid_p + proj_p) * 4          # bias / gamma / beta rows
           + (b_pad * feat_p + b_pad * proj_p) * 4          # resident outputs
           + 4 * b_pad * hid_p * 4)                         # z / dev / zn / a headroom
    vmem_limit = int(max(16 * 2**20,
                         min(int(0.85 * vmem_cap), int(1.5 * est) + (4 << 20))))

    flops = 2 * b_pad * (d_pad * feat_p + feat_p * hid_p + hid_p * proj_p)
    bytes_accessed = int(xp.nbytes) + sum(
        int(prepared[k].nbytes)
        for k in ("w1", "b1", "wp1", "bp1", "gamma", "beta", "wp2", "bp2"))
    bytes_accessed += b_pad * (proj_p + feat_p) * 4
    cost = pl.CostEstimate(flops=flops, transcendentals=hid_p,
                           bytes_accessed=bytes_accessed)

    grid_spec = pltpu.PrefetchScalarGridSpec(
        num_scalar_prefetch=1,                               # nb (real batch size)
        grid=(nk,),
        in_specs=[
            pl.BlockSpec((b_pad, tk), lambda k, nb: (0, k)),     # x K-tile
            pl.BlockSpec((tk, feat_p), lambda k, nb: (k, 0)),    # w1 K-tile
            pl.BlockSpec((1, feat_p), lambda k, nb: (0, 0)),     # b1
            pl.BlockSpec((1, hid_p), lambda k, nb: (0, 0)),      # bp1
            pl.BlockSpec((1, hid_p), lambda k, nb: (0, 0)),      # gamma
            pl.BlockSpec((1, hid_p), lambda k, nb: (0, 0)),      # beta
            pl.BlockSpec((1, proj_p), lambda k, nb: (0, 0)),     # bp2
            pl.BlockSpec(memory_space=pl.ANY),                   # wp1 (HBM, manual DMA)
            pl.BlockSpec(memory_space=pl.ANY),                   # wp2 (HBM, manual DMA)
        ],
        out_specs=(
            pl.BlockSpec((b_pad, proj_p), lambda k, nb: (0, 0)),  # projection
            pl.BlockSpec((b_pad, feat_p), lambda k, nb: (0, 0)),  # representation
        ),
        scratch_shapes=[
            pltpu.VMEM((feat_p, hid_p), jnp.bfloat16),            # wp1 scratch (x1)
            pltpu.VMEM((hid_p, proj_p), jnp.bfloat16),            # wp2 scratch (x1)
            pltpu.SemaphoreType.DMA((2,)),
        ],
    )

    proj_full, rep_full = pl.pallas_call(
        netwrapper_kernel,
        out_shape=(jax.ShapeDtypeStruct((b_pad, proj_p), jnp.float32),
                   jax.ShapeDtypeStruct((b_pad, feat_p), jnp.float32)),
        grid_spec=grid_spec,
        compiler_params=pltpu.CompilerParams(
            dimension_semantics=("arbitrary",),
            vmem_limit_bytes=vmem_limit),
        cost_estimate=cost,
    )(nb, xp, prepared["w1"], prepared["b1"],
      prepared["bp1"], prepared["gamma"], prepared["beta"], prepared["bp2"],
      prepared["wp1"], prepared["wp2"])

    return proj_full[:B, :proj], rep_full[:B, :feat]


def make_params(key, d_in, feat, proj_hidden, proj_size):
    ks = jax.random.split(key, 6)
    w1 = jax.random.normal(ks[0], (d_in, feat), jnp.float32) * 0.02
    b1 = jax.random.normal(ks[1], (1, feat), jnp.float32) * 0.01
    wp1 = jax.random.normal(ks[2], (feat, proj_hidden), jnp.float32) * 0.05
    bp1 = jax.random.normal(ks[3], (1, proj_hidden), jnp.float32) * 0.01
    gamma = jnp.ones((1, proj_hidden), jnp.float32)              # BN weight init
    beta = jnp.zeros((1, proj_hidden), jnp.float32)              # BN bias init
    wp2 = jax.random.normal(ks[4], (proj_hidden, proj_size), jnp.float32) * 0.05
    bp2 = jax.random.normal(ks[5], (1, proj_size), jnp.float32) * 0.01
    return (w1, b1, wp1, bp1, gamma, beta, wp2, bp2)


def reference_forward(x, params):
    # Mirrors the kernel's precision choices (bf16 MXU operands, f32 accumulate).
    (w1, b1, wp1, bp1, gamma, beta, wp2, bp2) = params
    xf = x.reshape(x.shape[0], -1)
    rep = jnp.maximum(
        jnp.dot(xf.astype(jnp.bfloat16), w1.astype(jnp.bfloat16),
                preferred_element_type=jnp.float32) + b1, 0.0)
    z = jnp.dot(rep.astype(jnp.bfloat16), wp1.astype(jnp.bfloat16),
                preferred_element_type=jnp.float32) + bp1
    mean = jnp.mean(z, axis=0, keepdims=True)
    var = jnp.mean((z - mean) ** 2, axis=0, keepdims=True)       # biased (train mode)
    a = jnp.maximum(gamma * (z - mean) * jax.lax.rsqrt(var + EPS) + beta, 0.0)
    proj = jnp.dot(a.astype(jnp.bfloat16), wp2.astype(jnp.bfloat16),
                   preferred_element_type=jnp.float32) + bp2
    return proj, rep


if __name__ == "__main__":
    B, C, H, W = 2, 4, 16, 16
    feat = 64            # backbone hidden-layer width (hook target)
    proj_hidden = 128    # projection_hidden_size
    proj_size = 32       # projection_size
    d_in = C * H * W

    key = jax.random.PRNGKey(0)
    kx, kp = jax.random.split(key)
    x = jax.random.normal(kx, (B, C, H, W), jnp.float32)
    params = make_params(kp, d_in, feat, proj_hidden, proj_size)

    prepared = prepare_params(params)            # one-time padding / bf16 cast
    projection, representation = netwrapper_forward(x, prepared)
    jax.block_until_ready((projection, representation))

    ref_proj, ref_rep = reference_forward(x, params)
    assert projection.shape == (B, proj_size)
    assert representation.shape == (B, feat)
    # Tolerances account for bf16 MXU operands (f32 accumulation) on both sides.
    assert jnp.allclose(representation, ref_rep, atol=2e-3, rtol=2e-3)
    assert jnp.allclose(projection, ref_proj, atol=2e-2, rtol=2e-2)

    print("KERNEL_OK")
</pallas_src>

<mosaic_0001>
module attributes {stable_mosaic.version = 11 : i64} {
  func.func @netwrapper_kernel(%arg0: i32, %arg1: memref<1xi32, #tpu.memory_space<smem>>, %arg2: memref<8x1024xbf16, #tpu.memory_space<vmem>>, %arg3: memref<1024x128xbf16, #tpu.memory_space<vmem>>, %arg4: memref<1x128xf32, #tpu.memory_space<vmem>>, %arg5: memref<1x128xf32, #tpu.memory_space<vmem>>, %arg6: memref<1x128xf32, #tpu.memory_space<vmem>>, %arg7: memref<1x128xf32, #tpu.memory_space<vmem>>, %arg8: memref<1x128xf32, #tpu.memory_space<vmem>>, %arg9: memref<128x128xbf16, #tpu.memory_space<any>>, %arg10: memref<128x128xbf16, #tpu.memory_space<any>>, %arg11: memref<8x128xf32, #tpu.memory_space<vmem>>, %arg12: memref<8x128xf32, #tpu.memory_space<vmem>>, %arg13: memref<128x128xbf16, #tpu.memory_space<vmem>>, %arg14: memref<128x128xbf16, #tpu.memory_space<vmem>>, %arg15: memref<2x!tpu.dma_semaphore, #tpu.memory_space<semaphore_mem>>) attributes {dimension_semantics = [#tpu.dimension_semantics<arbitrary>], iteration_bounds = array<i64: 1>, scalar_prefetch = 1 : i64, scratch_operands = 3 : i64, tpu.core_type = #tpu.core_type<tc>, window_params = [{transform_indices = @transform_0, window_bounds = array<i64: 8, 1024>}, {transform_indices = @transform_1, window_bounds = array<i64: 1024, 128>}, {pipeline_mode = #tpu.pipeline_mode<synchronous>, transform_indices = @transform_2, window_bounds = array<i64: 1, 128>}, {pipeline_mode = #tpu.pipeline_mode<synchronous>, transform_indices = @transform_3, window_bounds = array<i64: 1, 128>}, {pipeline_mode = #tpu.pipeline_mode<synchronous>, transform_indices = @transform_4, window_bounds = array<i64: 1, 128>}, {pipeline_mode = #tpu.pipeline_mode<synchronous>, transform_indices = @transform_5, window_bounds = array<i64: 1, 128>}, {pipeline_mode = #tpu.pipeline_mode<synchronous>, transform_indices = @transform_6, window_bounds = array<i64: 1, 128>}, {}, {}, {pipeline_mode = #tpu.pipeline_mode<synchronous>, transform_indices = @transform_9, window_bounds = array<i64: 8, 128>}, {pipeline_mode = #tpu.pipeline_mode<synchronous>, transform_indices = @transform_10, window_bounds = array<i64: 8, 128>}]} {
    %c0_i32 = arith.constant 0 : i32
    %0 = arith.cmpi eq, %arg0, %c0_i32 : i32
    %1 = arith.extui %0 : i1 to i32
    %c0_i32_0 = arith.constant 0 : i32
    %2 = arith.cmpi ne, %1, %c0_i32_0 : i32
    scf.if %2 {
      %cst_10 = arith.constant 0.000000e+00 : f32
      %12 = vector.broadcast %cst_10 : f32 to vector<8x128xf32>
      %c0_11 = arith.constant 0 : index
      %c0_12 = arith.constant 0 : index
      %13 = vector.load %arg12[%c0_11, %c0_12] : memref<8x128xf32, #tpu.memory_space<vmem>>, vector<8x128xf32>
      tpu.vector_store %arg12[%c0_11, %c0_12], %12 {strides = array<i32>} : memref<8x128xf32, #tpu.memory_space<vmem>>, vector<8x128xf32>,
      %c0_i32_13 = arith.constant 0 : i32
      %14 = tpu.memref_slice %arg15[%c0_i32_13] : memref<2x!tpu.dma_semaphore, #tpu.memory_space<semaphore_mem>> -> memref<1x!tpu.dma_semaphore, #tpu.memory_space<semaphore_mem>>
      %15 = tpu.memref_squeeze %14 : memref<1x!tpu.dma_semaphore, #tpu.memory_space<semaphore_mem>> -> memref<!tpu.dma_semaphore, #tpu.memory_space<semaphore_mem>>
      tpu.enqueue_dma source(%arg9 : memref<128x128xbf16, #tpu.memory_space<any>>) target(%arg13 : memref<128x128xbf16, #tpu.memory_space<vmem>>) target_semaphore(%15 : memref<!tpu.dma_semaphore, #tpu.memory_space<semaphore_mem>>)
      %c1_i32 = arith.constant 1 : i32
      %16 = tpu.memref_slice %arg15[%c1_i32] : memref<2x!tpu.dma_semaphore, #tpu.memory_space<semaphore_mem>> -> memref<1x!tpu.dma_semaphore, #tpu.memory_space<semaphore_mem>>
      %17 = tpu.memref_squeeze %16 : memref<1x!tpu.dma_semaphore, #tpu.memory_space<semaphore_mem>> -> memref<!tpu.dma_semaphore, #tpu.memory_space<semaphore_mem>>
      tpu.enqueue_dma source(%arg10 : memref<128x128xbf16, #tpu.memory_space<any>>) target(%arg14 : memref<128x128xbf16, #tpu.memory_space<vmem>>) target_semaphore(%17 : memref<!tpu.dma_semaphore, #tpu.memory_space<semaphore_mem>>)
    } else {
    }
    %c0 = arith.constant 0 : index
    %c0_1 = arith.constant 0 : index
    %3 = vector.load %arg12[%c0, %c0_1] : memref<8x128xf32, #tpu.memory_space<vmem>>, vector<8x128xf32>
    %c0_2 = arith.constant 0 : index
    %c0_3 = arith.constant 0 : index
    %4 = vector.load %arg2[%c0_2, %c0_3] : memref<8x1024xbf16, #tpu.memory_space<vmem>>, vector<8x1024xbf16>
    %c0_4 = arith.constant 0 : index
    %c0_5 = arith.constant 0 : index
    %5 = vector.load %arg3[%c0_4, %c0_5] : memref<1024x128xbf16, #tpu.memory_space<vmem>>, vector<1024x128xbf16>
    %cst = arith.constant dense<0.000000e+00> : vector<8x128xf32>
    %6 = tpu.matmul %4, %5, %cst {dimension_numbers = #tpu.dot_dimension_numbers<[1], [0], [0], [1], [0, 0, 1, 1], [], []>} : vector<8x1024xbf16>, vector<1024x128xbf16>, vector<8x128xf32> -> vector<8x128xf32>
    %7 = arith.addf %3, %6 : vector<8x128xf32>
    %c0_6 = arith.constant 0 : index
    %c0_7 = arith.constant 0 : index
    %8 = vector.load %arg12[%c0_6, %c0_7] : memref<8x128xf32, #tpu.memory_space<vmem>>, vector<8x128xf32>
    tpu.vector_store %arg12[%c0_6, %c0_7], %7 {strides = array<i32>} : memref<8x128xf32, #tpu.memory_space<vmem>>, vector<8x128xf32>,
    %c0_i32_8 = arith.constant 0 : i32
    %9 = arith.cmpi eq, %arg0, %c0_i32_8 : i32
    %10 = arith.extui %9 : i1 to i32
    %c0_i32_9 = arith.constant 0 : i32
    %11 = arith.cmpi ne, %10, %c0_i32_9 : i32
    scf.if %11 {
      %c0_10 = arith.constant 0 : index
      %c0_11 = arith.constant 0 : index
      %12 = vector.load %arg12[%c0_10, %c0_11] : memref<8x128xf32, #tpu.memory_space<vmem>>, vector<8x128xf32>
      %c0_12 = arith.constant 0 : index
      %c0_13 = arith.constant 0 : index
      %13 = vector.load %arg4[%c0_12, %c0_13] : memref<1x128xf32, #tpu.memory_space<vmem>>, vector<1x128xf32>
      %14 = vector.broadcast %13 : vector<1x128xf32> to vector<8x128xf32>
      %15 = arith.addf %12, %14 : vector<8x128xf32>
      %cst_14 = arith.constant 0.000000e+00 : f32
      %16 = vector.broadcast %cst_14 : f32 to vector<8x128xf32>
      %17 = arith.maximumf %15, %16 : vector<8x128xf32>
      %c0_15 = arith.constant 0 : index
      %c0_16 = arith.constant 0 : index
      %18 = vector.load %arg12[%c0_15, %c0_16] : memref<8x128xf32, #tpu.memory_space<vmem>>, vector<8x128xf32>
      tpu.vector_store %arg12[%c0_15, %c0_16], %17 {strides = array<i32>} : memref<8x128xf32, #tpu.memory_space<vmem>>, vector<8x128xf32>,
      %c0_i32_17 = arith.constant 0 : i32
      %19 = tpu.memref_slice %arg15[%c0_i32_17] : memref<2x!tpu.dma_semaphore, #tpu.memory_space<semaphore_mem>> -> memref<1x!tpu.dma_semaphore, #tpu.memory_space<semaphore_mem>>
      %20 = tpu.memref_squeeze %19 : memref<1x!tpu.dma_semaphore, #tpu.memory_space<semaphore_mem>> -> memref<!tpu.dma_semaphore, #tpu.memory_space<semaphore_mem>>
      tpu.wait_dma2 semaphore(%20 : memref<!tpu.dma_semaphore, #tpu.memory_space<semaphore_mem>>) src(%arg9 : memref<128x128xbf16, #tpu.memory_space<any>>) dst(%arg13 : memref<128x128xbf16, #tpu.memory_space<vmem>>)
      %c1_i32 = arith.constant 1 : i32
      %21 = tpu.memref_slice %arg15[%c1_i32] : memref<2x!tpu.dma_semaphore, #tpu.memory_space<semaphore_mem>> -> memref<1x!tpu.dma_semaphore, #tpu.memory_space<semaphore_mem>>
      %22 = tpu.memref_squeeze %21 : memref<1x!tpu.dma_semaphore, #tpu.memory_space<semaphore_mem>> -> memref<!tpu.dma_semaphore, #tpu.memory_space<semaphore_mem>>
      tpu.wait_dma2 semaphore(%22 : memref<!tpu.dma_semaphore, #tpu.memory_space<semaphore_mem>>) src(%arg10 : memref<128x128xbf16, #tpu.memory_space<any>>) dst(%arg14 : memref<128x128xbf16, #tpu.memory_space<vmem>>)
      %23 = arith.truncf %17 : vector<8x128xf32> to vector<8x128xbf16>
      %c0_18 = arith.constant 0 : index
      %c0_19 = arith.constant 0 : index
      %24 = vector.load %arg13[%c0_18, %c0_19] : memref<128x128xbf16, #tpu.memory_space<vmem>>, vector<128x128xbf16>
      %cst_20 = arith.constant dense<0.000000e+00> : vector<8x128xf32>
      %25 = tpu.matmul %23, %24, %cst_20 {dimension_numbers = #tpu.dot_dimension_numbers<[1], [0], [0], [1], [0, 0, 1, 1], [], []>} : vector<8x128xbf16>, vector<128x128xbf16>, vector<8x128xf32> -> vector<8x128xf32>
      %c0_21 = arith.constant 0 : index
      %c0_22 = arith.constant 0 : index
      %26 = vector.load %arg5[%c0_21, %c0_22] : memref<1x128xf32, #tpu.memory_space<vmem>>, vector<1x128xf32>
      %27 = vector.broadcast %26 : vector<1x128xf32> to vector<8x128xf32>
      %28 = arith.addf %25, %27 : vector<8x128xf32>
      %c0_23 = arith.constant 0 : index
      %29 = memref.load %arg1[%c0_23] : memref<1xi32, #tpu.memory_space<smem>>
      %30 = tpu.iota {dimensions = array<i32: 0>} : vector<8x128xi32>
      %31 = vector.broadcast %29 : i32 to vector<8x128xi32>
      %32 = arith.cmpi slt, %30, %31 : vector<8x128xi32>
      %33 = arith.sitofp %29 : i32 to f32
      %cst_24 = arith.constant 1.000000e+00 : f32
      %34 = arith.divf %cst_24, %33 : f32
      %cst_25 = arith.constant 0.000000e+00 : f32
      %35 = vector.broadcast %cst_25 : f32 to vector<8x128xf32>
      %36 = arith.select %32, %28, %35 : vector<8x128xi1>, vector<8x128xf32>
      %cst_26 = arith.constant dense<0.000000e+00> : vector<128xf32>
      %37 = vector.multi_reduction <add>, %36, %cst_26 [0] : vector<8x128xf32> to vector<128xf32>
      %38 = vector.shape_cast %37 : vector<128xf32> to vector<1x128xf32>
      %39 = vector.broadcast %34 : f32 to vector<1x128xf32>
      %40 = arith.mulf %38, %39 : vector<1x128xf32>
      %41 = vector.broadcast %40 : vector<1x128xf32> to vector<8x128xf32>
      %42 = arith.subf %28, %41 : vector<8x128xf32>
      %cst_27 = arith.constant 0.000000e+00 : f32
      %43 = vector.broadcast %cst_27 : f32 to vector<8x128xf32>
      %44 = arith.select %32, %42, %43 : vector<8x128xi1>, vector<8x128xf32>
      %45 = arith.mulf %44, %44 : vector<8x128xf32>
      %cst_28 = arith.constant dense<0.000000e+00> : vector<128xf32>
      %46 = vector.multi_reduction <add>, %45, %cst_28 [0] : vector<8x128xf32> to vector<128xf32>
      %47 = vector.shape_cast %46 : vector<128xf32> to vector<1x128xf32>
      %48 = vector.broadcast %34 : f32 to vector<1x128xf32>
      %49 = arith.mulf %47, %48 : vector<1x128xf32>
      %50 = vector.broadcast %40 : vector<1x128xf32> to vector<8x128xf32>
      %51 = arith.subf %28, %50 : vector<8x128xf32>
      %cst_29 = arith.constant 9.99999974E-6 : f32
      %52 = vector.broadcast %cst_29 : f32 to vector<1x128xf32>
      %53 = arith.addf %49, %52 : vector<1x128xf32>
      %54 = math.rsqrt %53 : vector<1x128xf32>
      %55 = vector.broadcast %54 : vector<1x128xf32> to vector<8x128xf32>
      %56 = arith.mulf %51, %55 : vector<8x128xf32>
      %c0_30 = arith.constant 0 : index
      %c0_31 = arith.constant 0 : index
      %57 = vector.load %arg6[%c0_30, %c0_31] : memref<1x128xf32, #tpu.memory_space<vmem>>, vector<1x128xf32>
      %58 = vector.broadcast %57 : vector<1x128xf32> to vector<8x128xf32>
      %59 = arith.mulf %56, %58 : vector<8x128xf32>
      %c0_32 = arith.constant 0 : index
      %c0_33 = arith.constant 0 : index
      %60 = vector.load %arg7[%c0_32, %c0_33] : memref<1x128xf32, #tpu.memory_space<vmem>>, vector<1x128xf32>
      %61 = vector.broadcast %60 : vector<1x128xf32> to vector<8x128xf32>
      %62 = arith.addf %59, %61 : vector<8x128xf32>
      %cst_34 = arith.constant 0.000000e+00 : f32
      %63 = vector.broadcast %cst_34 : f32 to vector<8x128xf32>
      %64 = arith.maximumf %62, %63 : vector<8x128xf32>
      %65 = arith.truncf %64 : vector<8x128xf32> to vector<8x128xbf16>
      %c0_35 = arith.constant 0 : index
      %c0_36 = arith.constant 0 : index
      %66 = vector.load %arg14[%c0_35, %c0_36] : memref<128x128xbf16, #tpu.memory_space<vmem>>, vector<128x128xbf16>
      %cst_37 = arith.constant dense<0.000000e+00> : vector<8x128xf32>
      %67 = tpu.matmul %65, %66, %cst_37 {dimension_numbers = #tpu.dot_dimension_numbers<[1], [0], [0], [1], [0, 0, 1, 1], [], []>} : vector<8x128xbf16>, vector<128x128xbf16>, vector<8x128xf32> -> vector<8x128xf32>
      %c0_38 = arith.constant 0 : index
      %c0_39 = arith.constant 0 : index
      %68 = vector.load %arg8[%c0_38, %c0_39] : memref<1x128xf32, #tpu.memory_space<vmem>>, vector<1x128xf32>
      %69 = vector.broadcast %68 : vector<1x128xf32> to vector<8x128xf32>
      %70 = arith.addf %67, %69 : vector<8x128xf32>
      %c0_40 = arith.constant 0 : index
      %c0_41 = arith.constant 0 : index
      %71 = vector.load %arg11[%c0_40, %c0_41] : memref<8x128xf32, #tpu.memory_space<vmem>>, vector<8x128xf32>
      tpu.vector_store %arg11[%c0_40, %c0_41], %70 {strides = array<i32>} : memref<8x128xf32, #tpu.memory_space<vmem>>, vector<8x128xf32>,
    } else {
    }
    return
  }
  func.func @transform_0(%arg0: i32, %arg1: memref<1xi32, #tpu.memory_space<smem>>) -> (i32, i32) {
    %c0_i32 = arith.constant 0 : i32
    %c0_i32_0 = arith.constant 0 : i32
    return %c0_i32, %arg0 : i32, i32
  }
  func.func @transform_1(%arg0: i32, %arg1: memref<1xi32, #tpu.memory_space<smem>>) -> (i32, i32) {
    %c0_i32 = arith.constant 0 : i32
    %c0_i32_0 = arith.constant 0 : i32
    return %arg0, %c0_i32 : i32, i32
  }
  func.func @transform_2(%arg0: i32, %arg1: memref<1xi32, #tpu.memory_space<smem>>) -> (i32, i32) {
    %c0_i32 = arith.constant 0 : i32
    %c0_i32_0 = arith.constant 0 : i32
    %c0_i32_1 = arith.constant 0 : i32
    return %c0_i32, %c0_i32_0 : i32, i32
  }
  func.func @transform_3(%arg0: i32, %arg1: memref<1xi32, #tpu.memory_space<smem>>) -> (i32, i32) {
    %c0_i32 = arith.constant 0 : i32
    %c0_i32_0 = arith.constant 0 : i32
    %c0_i32_1 = arith.constant 0 : i32
    return %c0_i32, %c0_i32_0 : i32, i32
  }
  func.func @transform_4(%arg0: i32, %arg1: memref<1xi32, #tpu.memory_space<smem>>) -> (i32, i32) {
    %c0_i32 = arith.constant 0 : i32
    %c0_i32_0 = arith.constant 0 : i32
    %c0_i32_1 = arith.constant 0 : i32
    return %c0_i32, %c0_i32_0 : i32, i32
  }
  func.func @transform_5(%arg0: i32, %arg1: memref<1xi32, #tpu.memory_space<smem>>) -> (i32, i32) {
    %c0_i32 = arith.constant 0 : i32
    %c0_i32_0 = arith.constant 0 : i32
    %c0_i32_1 = arith.constant 0 : i32
    return %c0_i32, %c0_i32_0 : i32, i32
  }
  func.func @transform_6(%arg0: i32, %arg1: memref<1xi32, #tpu.memory_space<smem>>) -> (i32, i32) {
    %c0_i32 = arith.constant 0 : i32
    %c0_i32_0 = arith.constant 0 : i32
    %c0_i32_1 = arith.constant 0 : i32
    return %c0_i32, %c0_i32_0 : i32, i32
  }
  func.func @transform_9(%arg0: i32, %arg1: memref<1xi32, #tpu.memory_space<smem>>) -> (i32, i32) {
    %c0_i32 = arith.constant 0 : i32
    %c0_i32_0 = arith.constant 0 : i32
    %c0_i32_1 = arith.constant 0 : i32
    return %c0_i32, %c0_i32_0 : i32, i32
  }
  func.func @transform_10(%arg0: i32, %arg1: memref<1xi32, #tpu.memory_space<smem>>) -> (i32, i32) {
    %c0_i32 = arith.constant 0 : i32
    %c0_i32_0 = arith.constant 0 : i32
    %c0_i32_1 = arith.constant 0 : i32
    return %c0_i32, %c0_i32_0 : i32, i32
  }
}

</mosaic_0001>

<llo_original>
// kernel: tpu_custom_call.1
$region0: #{tpu_custom_call.1}
  #allocation0 [shape = 'u32[]', space=smem, size = 0x4, offset = 0x4, fixed_abs, tag = 'smem constant byte address 0x4 - core index']
  #allocation1 [shape = 'u32[144,128]{1,0:T(1,128)}', space=vmem, size = 0x12000, scoped, tag = 'internal scratch']
  #allocation2 [shape = 'bf16[128,128]{1,0:T(16,128)(2,1)}', space=vmem, size = 0x8000, scoped, tag = 'scratch operand']
  #allocation3 [shape = 'bf16[128,128]{1,0:T(16,128)(2,1)}', space=vmem, size = 0x8000, scoped, tag = 'scratch operand']
  #allocation4 [shape = 's32[2]{0}', space=sflag, size = 0x8, scoped, tag = 'scratch operand']
  #allocation5 [shape = 's32[1]{0}', space=sflag, size = 0x4, scoped, tag = 'scoped memory for tpu_custom_call.1']
  #allocation6 [shape = 's32[1]{0:T(128)S(6)}', space=smem, size = 0x200, scoped, tag = 'prefetched SMEM operand 0']
  #allocation15 [shape = 's32[]', space=sflag, size = 0x4, offset = 0, fixed_abs, tag = 'sflag constant byte address 0x0 - dummy sync flag']
  #allocation16 [shape = 's32[]', space=sflag, size = 0x4, offset = 0, fixed_abs, tag = 'sflag constant byte address 0x0 - dummy sync flag']
  #allocation17 [shape = 'u32[]', space=smem, size = 0x4, offset = 0x44, fixed_abs, tag = 'smem constant byte address 0x44 - assertion arg 0']
  #allocation18 [shape = 'u32[]', space=smem, size = 0x4, offset = 0x48, fixed_abs, tag = 'smem constant byte address 0x48 - assertion arg 1']
  #allocation19 [shape = 's32[]', space=sflag, size = 0x4, offset = 0, fixed_abs, tag = 'sflag constant byte address 0x0 - dummy sync flag']
  #allocation20 [shape = 's32[]', space=sflag, size = 0x4, offset = 0, fixed_abs, tag = 'sflag constant byte address 0x0 - dummy sync flag']
  %s0 = inlined_call_operand.<no memory space> [shape: s32[1], index: 0, kind: input, shape index: {}]
  %s1 = inlined_call_operand.hbm [shape: bf16[8,1024], index: 1, kind: input, shape index: {}]
  %s2 = inlined_call_operand.hbm [shape: bf16[1024,128], index: 2, kind: input, shape index: {}]
  %s3 = inlined_call_operand.vmem [shape: f32[1,128], index: 3, kind: input, shape index: {}]
  %s4 = inlined_call_operand.vmem [shape: f32[1,128], index: 4, kind: input, shape index: {}]
  %s5 = inlined_call_operand.vmem [shape: f32[1,128], index: 5, kind: input, shape index: {}]
  %s6 = inlined_call_operand.vmem [shape: f32[1,128], index: 6, kind: input, shape index: {}]
  %s7 = inlined_call_operand.vmem [shape: f32[1,128], index: 7, kind: input, shape index: {}]
  %s8 = inlined_call_operand.hbm [shape: bf16[128,128], index: 8, kind: input, shape index: {}]
  %s9 = inlined_call_operand.hbm [shape: bf16[128,128], index: 9, kind: input, shape index: {}]
  %s10 = inlined_call_operand.hbm [shape: f32[8,128], index: 10, kind: output, shape index: {0}]
  %s11 = inlined_call_operand.hbm [shape: f32[8,128], index: 11, kind: output, shape index: {1}]
  %12 = xla_tuple %s10, %s11
  %s13 = sld [smem:[#allocation0]]
  $region70: #{tpu_custom_call.1} parent=0
    _
  %s15 = ssub.s32 1, %s13
  %s16 = scalar_select 0, %s15, %s13
  %17 = sst [smem:[#allocation6]] %s0
  $region1: #{tpu_custom_call.1} parent=0
    #allocation7 [shape = 'u8[16384]{0}', space=vmem, size = 0x4000, scoped, tag = 'input window, operand 1, single buffered']
    #allocation8 [shape = 's32[1]{0}', space=sflag, size = 0x4, scoped, tag = 'scoped memory for tpu_custom_call.1']
    #allocation9 [shape = 's32[1]{0}', space=sflag, size = 0x4, scoped, tag = 'scoped memory for tpu_custom_call.1']
    #allocation10 [shape = 'u8[262144]{0}', space=vmem, size = 0x40000, scoped, tag = 'input window, operand 2, single buffered']
    #allocation11 [shape = 's32[1]{0}', space=sflag, size = 0x4, scoped, tag = 'scoped memory for tpu_custom_call.1']
    #allocation12 [shape = 'u8[4096]{0}', space=vmem, size = 0x1000, scoped, tag = 'output window, operand 0, single buffered']
    #allocation13 [shape = 'u8[4096]{0}', space=vmem, size = 0x1000, scoped, tag = 'output window, operand 1, single buffered']
    #allocation14 [shape = 's32[1]{0}', space=sflag, size = 0x4, scoped, tag = 'scoped memory for tpu_custom_call.1']
    %18 = vsyncpa [#allocation8], 0
    %19 = vsyncpa [#allocation11], 0
    %20 = vsyncpa [#allocation9], 0
    %21 = vsyncpa [#allocation14], 0
    // Predicated region
    $region2: #{tpu_custom_call.1} parent=1 // pred_check
      _
    $region3: #{tpu_custom_call.1} parent=1 // pred_check_branch
      %23 = sbr.rel (0) target = $region5
    $region4: #{tpu_custom_call.1} parent=1 // pred_region
      %s25 = ssub.s32 512, 512
      %26 = vsyncadd [#allocation8], %s25
      %s28 = sshll.u32 [#allocation7], 4
      %s29 = int_to_ptr.vmem [resolvable:$true] %s28
      %31 = dma.hbm_to_vmem [thread:$0]  %s1, 512, %s29, [#allocation8]
    $region5: #{tpu_custom_call.1} parent=1 // pred_fallthru
      _
    // Predicated region
    $region6: #{tpu_custom_call.1} parent=1 // pred_check
      _
    $region7: #{tpu_custom_call.1} parent=1 // pred_check_branch
      %33 = sbr.rel (0) target = $region9
    $region8: #{tpu_custom_call.1} parent=1 // pred_region
      %s35 = ssub.s32 8192, 8192
      %36 = vsyncadd [#allocation11], %s35
      %s37 = sshll.u32 [#allocation10], 4
      %s38 = int_to_ptr.vmem [resolvable:$true] %s37
      %43 = dma.hbm_to_vmem [thread:$0]  %s2, 8192, %s38, [#allocation11], 64, 64, 4
    $region9: #{tpu_custom_call.1} parent=1 // pred_fallthru
      _
    // Predicated region
    $region10: #{tpu_custom_call.1} parent=1 // pred_check
      _
    $region11: #{tpu_custom_call.1} parent=1 // pred_check_branch
      %45 = sbr.rel (0) target = $region13
    $region12: #{tpu_custom_call.1} parent=1 // pred_region
      _
    $region13: #{tpu_custom_call.1} parent=1 // pred_fallthru
      _
    // Predicated region
    $region14: #{tpu_custom_call.1} parent=1 // pred_check
      _
    $region15: #{tpu_custom_call.1} parent=1 // pred_check_branch
      %47 = sbr.rel (0) target = $region17
    $region16: #{tpu_custom_call.1} parent=1 // pred_region
      _
    $region17: #{tpu_custom_call.1} parent=1 // pred_fallthru
      _
    // Predicated region
    $region18: #{tpu_custom_call.1} parent=1 // pred_check
      _
    $region19: #{tpu_custom_call.1} parent=1 // pred_check_branch
      %49 = sbr.rel (0) target = $region21
    $region20: #{tpu_custom_call.1} parent=1 // pred_region
      _
    $region21: #{tpu_custom_call.1} parent=1 // pred_fallthru
      _
    // Predicated region
    $region22: #{tpu_custom_call.1} parent=1 // pred_check
      _
    $region23: #{tpu_custom_call.1} parent=1 // pred_check_branch
      %51 = sbr.rel (0) target = $region25
    $region24: #{tpu_custom_call.1} parent=1 // pred_region
      _
    $region25: #{tpu_custom_call.1} parent=1 // pred_fallthru
      _
    // Predicated region
    $region26: #{tpu_custom_call.1} parent=1 // pred_check
      _
    $region27: #{tpu_custom_call.1} parent=1 // pred_check_branch
      %53 = sbr.rel (0) target = $region29
    $region28: #{tpu_custom_call.1} parent=1 // pred_region
      _
    $region29: #{tpu_custom_call.1} parent=1 // pred_fallthru
      _
    // Predicated region
    $region30: #{tpu_custom_call.1} parent=1 // pred_check
      _
    $region31: #{tpu_custom_call.1} parent=1 // pred_check_branch
      %55 = sbr.rel (0) target = $region33
    $region32: #{tpu_custom_call.1} parent=1 // pred_region
      %56 = dma.done [#allocation8], 512
    $region33: #{tpu_custom_call.1} parent=1 // pred_fallthru
      _
    // Predicated region
    $region34: #{tpu_custom_call.1} parent=1 // pred_check
      _
    $region35: #{tpu_custom_call.1} parent=1 // pred_check_branch
      %58 = sbr.rel (0) target = $region37
    $region36: #{tpu_custom_call.1} parent=1 // pred_region
      %59 = dma.done [#allocation11], 8192
    $region37: #{tpu_custom_call.1} parent=1 // pred_fallthru
      _
    %p61 = scmp.eq.s32.totalorder 0, 0
    // Predicated region
    $region38: #{tpu_custom_call.1} parent=1 // pred_check
      %p62 = pneg %p61
    $region39: #{tpu_custom_call.1} parent=1 // pred_check_branch
      %64 = sbr.rel (%p62) target = $region41
    $region40: #{tpu_custom_call.1} parent=1 // pred_region
      %65 = vst [vmem:[#allocation13] sm:$0xff] 0.0
      // Predicated region
      $region42: #{tpu_custom_call.1} parent=40 // pred_check
        _
      $region43: #{tpu_custom_call.1} parent=40 // pred_check_branch
        %67 = sbr.rel target = $region45
      $region44: #{tpu_custom_call.1} parent=40 // pred_region
        %68 = sst [smem:[#allocation17]] [#allocation16]
        %69 = sst [smem:[#allocation18]] [#allocation15]
      $region45: #{tpu_custom_call.1} parent=40 // pred_fallthru
        _
      %71 = shalt.err (0)
      %s73 = sshll.u32 [#allocation2], 4
      %s74 = int_to_ptr.vmem [resolvable:$true] %s73
      %76 = dma.hbm_to_vmem [thread:$0]  %s8, 1024, %s74, [#allocation4]
      %s77 = scalar_lea.sflag [#allocation4], 1
      // Predicated region
      $region46: #{tpu_custom_call.1} parent=40 // pred_check
        _
      $region47: #{tpu_custom_call.1} parent=40 // pred_check_branch
        %79 = sbr.rel target = $region49
      $region48: #{tpu_custom_call.1} parent=40 // pred_region
        %80 = sst [smem:[#allocation17]] [#allocation20]
        %81 = sst [smem:[#allocation18]] [#allocation19]
      $region49: #{tpu_custom_call.1} parent=40 // pred_fallthru
        _
      %83 = shalt.err (0)
      %s85 = sshll.u32 [#allocation3], 4
      %s86 = int_to_ptr.vmem [resolvable:$true] %s85
      %88 = dma.hbm_to_vmem [thread:$0]  %s9, 1024, %s86, %s77
    $region41: #{tpu_custom_call.1} parent=1 // pred_fallthru
      _
    %v89 = vld [vmem:[#allocation13] sm:$0xff]
    %v90 = vld [vmem:[#allocation7] sm:$0xff]
    %v91 = vld [vmem:[#allocation7 + $0x8] sm:$0xff]
    %v92 = vld [vmem:[#allocation7 + $0x10] sm:$0xff]
    %v93 = vld [vmem:[#allocation7 + $0x18] sm:$0xff]
    %v94 = vld [vmem:[#allocation10] sm:$0xf]
    %v95 = vld [vmem:[#allocation10 + $0x4] sm:$0xf]
    %v96 = vld [vmem:[#allocation10 + $0x8] sm:$0xf]
    %v97 = vld [vmem:[#allocation10 + $0xc] sm:$0xf]
    %v98 = vld [vmem:[#allocation10 + $0x10] sm:$0xf]
    %v99 = vld [vmem:[#allocation10 + $0x14] sm:$0xf]
    %v100 = vld [vmem:[#allocation10 + $0x18] sm:$0xf]
    %v101 = vld [vmem:[#allocation10 + $0x1c] sm:$0xf]
    %v102 = vld [vmem:[#allocation10 + $0x20] sm:$0xf]
    %v103 = vld [vmem:[#allocation10 + $0x24] sm:$0xf]
    %v104 = vld [vmem:[#allocation10 + $0x28] sm:$0xf]
    %v105 = vld [vmem:[#allocation10 + $0x2c] sm:$0xf]
    %v106 = vld [vmem:[#allocation10 + $0x30] sm:$0xf]
    %v107 = vld [vmem:[#allocation10 + $0x34] sm:$0xf]
    %v108 = vld [vmem:[#allocation10 + $0x38] sm:$0xf]
    %v109 = vld [vmem:[#allocation10 + $0x3c] sm:$0xf]
    %v110 = vld [vmem:[#allocation10 + $0x40] sm:$0xf]
    %v111 = vld [vmem:[#allocation10 + $0x44] sm:$0xf]
    %v112 = vld [vmem:[#allocation10 + $0x48] sm:$0xf]
    %v113 = vld [vmem:[#allocation10 + $0x4c] sm:$0xf]
    %v114 = vld [vmem:[#allocation10 + $0x50] sm:$0xf]
    %v115 = vld [vmem:[#allocation10 + $0x54] sm:$0xf]
    %v116 = vld [vmem:[#allocation10 + $0x58] sm:$0xf]
    %v117 = vld [vmem:[#allocation10 + $0x5c] sm:$0xf]
    %v118 = vld [vmem:[#allocation10 + $0x60] sm:$0xf]
    %v119 = vld [vmem:[#allocation10 + $0x64] sm:$0xf]
    %v120 = vld [vmem:[#allocation10 + $0x68] sm:$0xf]
    %v121 = vld [vmem:[#allocation10 + $0x6c] sm:$0xf]
    %v122 = vld [vmem:[#allocation10 + $0x70] sm:$0xf]
    %v123 = vld [vmem:[#allocation10 + $0x74] sm:$0xf]
    %v124 = vld [vmem:[#allocation10 + $0x78] sm:$0xf]
    %v125 = vld [vmem:[#allocation10 + $0x7c] sm:$0xf]
    %v126 = vld [vmem:[#allocation10 + $0x80] sm:$0xf]
    %v127 = vld [vmem:[#allocation10 + $0x84] sm:$0xf]
    %v128 = vld [vmem:[#allocation10 + $0x88] sm:$0xf]
    %v129 = vld [vmem:[#allocation10 + $0x8c] sm:$0xf]
    %v130 = vld [vmem:[#allocation10 + $0x90] sm:$0xf]
    %v131 = vld [vmem:[#allocation10 + $0x94] sm:$0xf]
    %v132 = vld [vmem:[#allocation10 + $0x98] sm:$0xf]
    %v133 = vld [vmem:[#allocation10 + $0x9c] sm:$0xf]
    %v134 = vld [vmem:[#allocation10 + $0xa0] sm:$0xf]
    %v135 = vld [vmem:[#allocation10 + $0xa4] sm:$0xf]
    %v136 = vld [vmem:[#allocation10 + $0xa8] sm:$0xf]
    %v137 = vld [vmem:[#allocation10 + $0xac] sm:$0xf]
    %v138 = vld [vmem:[#allocation10 + $0xb0] sm:$0xf]
    %v139 = vld [vmem:[#allocation10 + $0xb4] sm:$0xf]
    %v140 = vld [vmem:[#allocation10 + $0xb8] sm:$0xf]
    %v141 = vld [vmem:[#allocation10 + $0xbc] sm:$0xf]
    %v142 = vld [vmem:[#allocation10 + $0xc0] sm:$0xf]
    %v143 = vld [vmem:[#allocation10 + $0xc4] sm:$0xf]
    %v144 = vld [vmem:[#allocation10 + $0xc8] sm:$0xf]
    %v145 = vld [vmem:[#allocation10 + $0xcc] sm:$0xf]
    %v146 = vld [vmem:[#allocation10 + $0xd0] sm:$0xf]
    %v147 = vld [vmem:[#allocation10 + $0xd4] sm:$0xf]
    %v148 = vld [vmem:[#allocation10 + $0xd8] sm:$0xf]
    %v149 = vld [vmem:[#allocation10 + $0xdc] sm:$0xf]
    %v150 = vld [vmem:[#allocation10 + $0xe0] sm:$0xf]
    %v151 = vld [vmem:[#allocation10 + $0xe4] sm:$0xf]
    %v152 = vld [vmem:[#allocation10 + $0xe8] sm:$0xf]
    %v153 = vld [vmem:[#allocation10 + $0xec] sm:$0xf]
    %v154 = vld [vmem:[#allocation10 + $0xf0] sm:$0xf]
    %v155 = vld [vmem:[#allocation10 + $0xf4] sm:$0xf]
    %v156 = vld [vmem:[#allocation10 + $0xf8] sm:$0xf]
    %v157 = vld [vmem:[#allocation10 + $0xfc] sm:$0xf]
    %v158 = vld [vmem:[#allocation10 + $0x100] sm:$0xf]
    %v159 = vld [vmem:[#allocation10 + $0x104] sm:$0xf]
    %v160 = vld [vmem:[#allocation10 + $0x108] sm:$0xf]
    %v161 = vld [vmem:[#allocation10 + $0x10c] sm:$0xf]
    %v162 = vld [vmem:[#allocation10 + $0x110] sm:$0xf]
    %v163 = vld [vmem:[#allocation10 + $0x114] sm:$0xf]
    %v164 = vld [vmem:[#allocation10 + $0x118] sm:$0xf]
    %v165 = vld [vmem:[#allocation10 + $0x11c] sm:$0xf]
    %v166 = vld [vmem:[#allocation10 + $0x120] sm:$0xf]
    %v167 = vld [vmem:[#allocation10 + $0x124] sm:$0xf]
    %v168 = vld [vmem:[#allocation10 + $0x128] sm:$0xf]
    %v169 = vld [vmem:[#allocation10 + $0x12c] sm:$0xf]
    %v170 = vld [vmem:[#allocation10 + $0x130] sm:$0xf]
    %v171 = vld [vmem:[#allocation10 + $0x134] sm:$0xf]
    %v172 = vld [vmem:[#allocation10 + $0x138] sm:$0xf]
    %v173 = vld [vmem:[#allocation10 + $0x13c] sm:$0xf]
    %v174 = vld [vmem:[#allocation10 + $0x140] sm:$0xf]
    %v175 = vld [vmem:[#allocation10 + $0x144] sm:$0xf]
    %v176 = vld [vmem:[#allocation10 + $0x148] sm:$0xf]
    %v177 = vld [vmem:[#allocation10 + $0x14c] sm:$0xf]
    %v178 = vld [vmem:[#allocation10 + $0x150] sm:$0xf]
    %v179 = vld [vmem:[#allocation10 + $0x154] sm:$0xf]
    %v180 = vld [vmem:[#allocation10 + $0x158] sm:$0xf]
    %v181 = vld [vmem:[#allocation10 + $0x15c] sm:$0xf]
    %v182 = vld [vmem:[#allocation10 + $0x160] sm:$0xf]
    %v183 = vld [vmem:[#allocation10 + $0x164] sm:$0xf]
    %v184 = vld [vmem:[#allocation10 + $0x168] sm:$0xf]
    %v185 = vld [vmem:[#allocation10 + $0x16c] sm:$0xf]
    %v186 = vld [vmem:[#allocation10 + $0x170] sm:$0xf]
    %v187 = vld [vmem:[#allocation10 + $0x174] sm:$0xf]
    %v188 = vld [vmem:[#allocation10 + $0x178] sm:$0xf]
    %v189 = vld [vmem:[#allocation10 + $0x17c] sm:$0xf]
    %v190 = vld [vmem:[#allocation10 + $0x180] sm:$0xf]
    %v191 = vld [vmem:[#allocation10 + $0x184] sm:$0xf]
    %v192 = vld [vmem:[#allocation10 + $0x188] sm:$0xf]
    %v193 = vld [vmem:[#allocation10 + $0x18c] sm:$0xf]
    %v194 = vld [vmem:[#allocation10 + $0x190] sm:$0xf]
    %v195 = vld [vmem:[#allocation10 + $0x194] sm:$0xf]
    %v196 = vld [vmem:[#allocation10 + $0x198] sm:$0xf]
    %v197 = vld [vmem:[#allocation10 + $0x19c] sm:$0xf]
    %v198 = vld [vmem:[#allocation10 + $0x1a0] sm:$0xf]
    %v199 = vld [vmem:[#allocation10 + $0x1a4] sm:$0xf]
    %v200 = vld [vmem:[#allocation10 + $0x1a8] sm:$0xf]
    %v201 = vld [vmem:[#allocation10 + $0x1ac] sm:$0xf]
    %v202 = vld [vmem:[#allocation10 + $0x1b0] sm:$0xf]
    %v203 = vld [vmem:[#allocation10 + $0x1b4] sm:$0xf]
    %v204 = vld [vmem:[#allocation10 + $0x1b8] sm:$0xf]
    %v205 = vld [vmem:[#allocation10 + $0x1bc] sm:$0xf]
    %v206 = vld [vmem:[#allocation10 + $0x1c0] sm:$0xf]
    %v207 = vld [vmem:[#allocation10 + $0x1c4] sm:$0xf]
    %v208 = vld [vmem:[#allocation10 + $0x1c8] sm:$0xf]
    %v209 = vld [vmem:[#allocation10 + $0x1cc] sm:$0xf]
    %v210 = vld [vmem:[#allocation10 + $0x1d0] sm:$0xf]
    %v211 = vld [vmem:[#allocation10 + $0x1d4] sm:$0xf]
    %v212 = vld [vmem:[#allocation10 + $0x1d8] sm:$0xf]
    %v213 = vld [vmem:[#allocation10 + $0x1dc] sm:$0xf]
    %v214 = vld [vmem:[#allocation10 + $0x1e0] sm:$0xf]
    %v215 = vld [vmem:[#allocation10 + $0x1e4] sm:$0xf]
    %v216 = vld [vmem:[#allocation10 + $0x1e8] sm:$0xf]
    %v217 = vld [vmem:[#allocation10 + $0x1ec] sm:$0xf]
    %v218 = vld [vmem:[#allocation10 + $0x1f0] sm:$0xf]
    %v219 = vld [vmem:[#allocation10 + $0x1f4] sm:$0xf]
    %v220 = vld [vmem:[#allocation10 + $0x1f8] sm:$0xf]
    %v221 = vld [vmem:[#allocation10 + $0x1fc] sm:$0xf]
    %v226 = vunpack.c.l.b16 %v90
    %v227 = vunpack.c.h.b16 %v90
    %v228 = vunpack.c.l.b16 %v91
    %v229 = vunpack.c.h.b16 %v91
    %v230 = vunpack.c.l.b16 %v92
    %v231 = vunpack.c.h.b16 %v92
    %v232 = vunpack.c.l.b16 %v93
    %v233 = vunpack.c.h.b16 %v93
    %v234 = vpack.c.b16 %v226, %v226
    %v235 = vpack.c.b16 %v227, %v227
    %v236 = vpack.c.b16 %v228, %v228
    %v237 = vpack.c.b16 %v229, %v229
    %v238 = vpack.c.b16 %v230, %v230
    %v239 = vpack.c.b16 %v231, %v231
    %v240 = vpack.c.b16 %v232, %v232
    %v241 = vpack.c.b16 %v233, %v233
    %v378 = vunpack.c.l.b16 %v94
    %v379 = vunpack.c.l.b16 %v95
    %v380 = vunpack.c.l.b16 %v96
    %v381 = vunpack.c.l.b16 %v97
    %v382 = vunpack.c.l.b16 %v98
    %v383 = vunpack.c.l.b16 %v99
    %v384 = vunpack.c.l.b16 %v100
    %v385 = vunpack.c.l.b16 %v101
    %v386 = vunpack.c.l.b16 %v102
    %v387 = vunpack.c.l.b16 %v103
    %v388 = vunpack.c.l.b16 %v104
    %v389 = vunpack.c.l.b16 %v105
    %v390 = vunpack.c.l.b16 %v106
    %v391 = vunpack.c.l.b16 %v107
    %v392 = vunpack.c.l.b16 %v108
    %v393 = vunpack.c.l.b16 %v109
    %v394 = vunpack.c.l.b16 %v110
    %v395 = vunpack.c.l.b16 %v111
    %v396 = vunpack.c.l.b16 %v112
    %v397 = vunpack.c.l.b16 %v113
    %v398 = vunpack.c.l.b16 %v114
    %v399 = vunpack.c.l.b16 %v115
    %v400 = vunpack.c.l.b16 %v116
    %v401 = vunpack.c.l.b16 %v117
    %v402 = vunpack.c.l.b16 %v118
    %v403 = vunpack.c.l.b16 %v119
    %v404 = vunpack.c.l.b16 %v120
    %v405 = vunpack.c.l.b16 %v121
    %v406 = vunpack.c.l.b16 %v122
    %v407 = vunpack.c.l.b16 %v123
    %v408 = vunpack.c.l.b16 %v124
    %v409 = vunpack.c.l.b16 %v125
    %v410 = vunpack.c.l.b16 %v126
    %v411 = vunpack.c.l.b16 %v127
    %v412 = vunpack.c.l.b16 %v128
    %v413 = vunpack.c.l.b16 %v129
    %v414 = vunpack.c.l.b16 %v130
    %v415 = vunpack.c.l.b16 %v131
    %v416 = vunpack.c.l.b16 %v132
    %v417 = vunpack.c.l.b16 %v133
    %v418 = vunpack.c.l.b16 %v134
    %v419 = vunpack.c.l.b16 %v135
    %v420 = vunpack.c.l.b16 %v136
    %v421 = vunpack.c.l.b16 %v137
    %v422 = vunpack.c.l.b16 %v138
    %v423 = vunpack.c.l.b16 %v139
    %v424 = vunpack.c.l.b16 %v140
    %v425 = vunpack.c.l.b16 %v141
    %v426 = vunpack.c.l.b16 %v142
    %v427 = vunpack.c.l.b16 %v143
    %v428 = vunpack.c.l.b16 %v144
    %v429 = vunpack.c.l.b16 %v145
    %v430 = vunpack.c.l.b16 %v146
    %v431 = vunpack.c.l.b16 %v147
    %v432 = vunpack.c.l.b16 %v148
    %v433 = vunpack.c.l.b16 %v149
    %v434 = vunpack.c.l.b16 %v150
    %v435 = vunpack.c.l.b16 %v151
    %v436 = vunpack.c.l.b16 %v152
    %v437 = vunpack.c.l.b16 %v153
    %v438 = vunpack.c.l.b16 %v154
    %v439 = vunpack.c.l.b16 %v155
    %v440 = vunpack.c.l.b16 %v156
    %v441 = vunpack.c.l.b16 %v157
    %v442 = vunpack.c.l.b16 %v158
    %v443 = vunpack.c.l.b16 %v159
    %v444 = vunpack.c.l.b16 %v160
    %v445 = vunpack.c.l.b16 %v161
    %v446 = vunpack.c.l.b16 %v162
    %v447 = vunpack.c.l.b16 %v163
    %v448 = vunpack.c.l.b16 %v164
    %v449 = vunpack.c.l.b16 %v165
    %v450 = vunpack.c.l.b16 %v166
    %v451 = vunpack.c.l.b16 %v167
    %v452 = vunpack.c.l.b16 %v168
    %v453 = vunpack.c.l.b16 %v169
    %v454 = vunpack.c.l.b16 %v170
    %v455 = vunpack.c.l.b16 %v171
    %v456 = vunpack.c.l.b16 %v172
    %v457 = vunpack.c.l.b16 %v173
    %v458 = vunpack.c.l.b16 %v174
    %v459 = vunpack.c.l.b16 %v175
    %v460 = vunpack.c.l.b16 %v176
    %v461 = vunpack.c.l.b16 %v177
    %v462 = vunpack.c.l.b16 %v178
    %v463 = vunpack.c.l.b16 %v179
    %v464 = vunpack.c.l.b16 %v180
    %v465 = vunpack.c.l.b16 %v181
    %v466 = vunpack.c.l.b16 %v182
    %v467 = vunpack.c.l.b16 %v183
    %v468 = vunpack.c.l.b16 %v184
    %v469 = vunpack.c.l.b16 %v185
    %v470 = vunpack.c.l.b16 %v186
    %v471 = vunpack.c.l.b16 %v187
    %v472 = vunpack.c.l.b16 %v188
    %v473 = vunpack.c.l.b16 %v189
    %v474 = vunpack.c.l.b16 %v190
    %v475 = vunpack.c.l.b16 %v191
    %v476 = vunpack.c.l.b16 %v192
    %v477 = vunpack.c.l.b16 %v193
    %v478 = vunpack.c.l.b16 %v194
    %v479 = vunpack.c.l.b16 %v195
    %v480 = vunpack.c.l.b16 %v196
    %v481 = vunpack.c.l.b16 %v197
    %v482 = vunpack.c.l.b16 %v198
    %v483 = vunpack.c.l.b16 %v199
    %v484 = vunpack.c.l.b16 %v200
    %v485 = vunpack.c.l.b16 %v201
    %v486 = vunpack.c.l.b16 %v202
    %v487 = vunpack.c.l.b16 %v203
    %v488 = vunpack.c.l.b16 %v204
    %v489 = vunpack.c.l.b16 %v205
    %v490 = vunpack.c.l.b16 %v206
    %v491 = vunpack.c.l.b16 %v207
    %v492 = vunpack.c.l.b16 %v208
    %v493 = vunpack.c.l.b16 %v209
    %v494 = vunpack.c.l.b16 %v210
    %v495 = vunpack.c.l.b16 %v211
    %v496 = vunpack.c.l.b16 %v212
    %v497 = vunpack.c.l.b16 %v213
    %v498 = vunpack.c.l.b16 %v214
    %v499 = vunpack.c.l.b16 %v215
    %v500 = vunpack.c.l.b16 %v216
    %v501 = vunpack.c.l.b16 %v217
    %v502 = vunpack.c.l.b16 %v218
    %v503 = vunpack.c.l.b16 %v219
    %v504 = vunpack.c.l.b16 %v220
    %v505 = vunpack.c.l.b16 %v221
    %v506 = vpack.c.b16 %v379, %v378
    %v507 = vpack.c.b16 %v381, %v380
    %v508 = vpack.c.b16 %v383, %v382
    %v509 = vpack.c.b16 %v385, %v384
    %v510 = vpack.c.b16 %v387, %v386
    %v511 = vpack.c.b16 %v389, %v388
    %v512 = vpack.c.b16 %v391, %v390
    %v513 = vpack.c.b16 %v393, %v392
    %v514 = vpack.c.b16 %v395, %v394
    %v515 = vpack.c.b16 %v397, %v396
    %v516 = vpack.c.b16 %v399, %v398
    %v517 = vpack.c.b16 %v401, %v400
    %v518 = vpack.c.b16 %v403, %v402
    %v519 = vpack.c.b16 %v405, %v404
    %v520 = vpack.c.b16 %v407, %v406
    %v521 = vpack.c.b16 %v409, %v408
    %v522 = vpack.c.b16 %v411, %v410
    %v523 = vpack.c.b16 %v413, %v412
    %v524 = vpack.c.b16 %v415, %v414
    %v525 = vpack.c.b16 %v417, %v416
    %v526 = vpack.c.b16 %v419, %v418
    %v527 = vpack.c.b16 %v421, %v420
    %v528 = vpack.c.b16 %v423, %v422
    %v529 = vpack.c.b16 %v425, %v424
    %v530 = vpack.c.b16 %v427, %v426
    %v531 = vpack.c.b16 %v429, %v428
    %v532 = vpack.c.b16 %v431, %v430
    %v533 = vpack.c.b16 %v433, %v432
    %v534 = vpack.c.b16 %v435, %v434
    %v535 = vpack.c.b16 %v437, %v436
    %v536 = vpack.c.b16 %v439, %v438
    %v537 = vpack.c.b16 %v441, %v440
    %v538 = vpack.c.b16 %v443, %v442
    %v539 = vpack.c.b16 %v445, %v444
    %v540 = vpack.c.b16 %v447, %v446
    %v541 = vpack.c.b16 %v449, %v448
    %v542 = vpack.c.b16 %v451, %v450
    %v543 = vpack.c.b16 %v453, %v452
    %v544 = vpack.c.b16 %v455, %v454
    %v545 = vpack.c.b16 %v457, %v456
    %v546 = vpack.c.b16 %v459, %v458
    %v547 = vpack.c.b16 %v461, %v460
    %v548 = vpack.c.b16 %v463, %v462
    %v549 = vpack.c.b16 %v465, %v464
    %v550 = vpack.c.b16 %v467, %v466
    %v551 = vpack.c.b16 %v469, %v468
    %v552 = vpack.c.b16 %v471, %v470
    %v553 = vpack.c.b16 %v473, %v472
    %v554 = vpack.c.b16 %v475, %v474
    %v555 = vpack.c.b16 %v477, %v476
    %v556 = vpack.c.b16 %v479, %v478
    %v557 = vpack.c.b16 %v481, %v480
    %v558 = vpack.c.b16 %v483, %v482
    %v559 = vpack.c.b16 %v485, %v484
    %v560 = vpack.c.b16 %v487, %v486
    %v561 = vpack.c.b16 %v489, %v488
    %v562 = vpack.c.b16 %v491, %v490
    %v563 = vpack.c.b16 %v493, %v492
    %v564 = vpack.c.b16 %v495, %v494
    %v565 = vpack.c.b16 %v497, %v496
    %v566 = vpack.c.b16 %v499, %v498
    %v567 = vpack.c.b16 %v501, %v500
    %v568 = vpack.c.b16 %v503, %v502
    %v569 = vpack.c.b16 %v505, %v504
    %634 = vmatprep.subr.bf16.mxu0 0
    %635 = vmatpush1.bf16.msra.mxu0 %v506
    %636 = vmatprep.subr.bf16.mxu0 0
    %637 = vmatpush1.bf16.msra.mxu0 %v507
    %638 = vmatprep.subr.bf16.mxu0 0
    %639 = vmatpush1.bf16.msra.mxu0 %v508
    %640 = vmatprep.subr.bf16.mxu0 0
    %641 = vmatpush1.bf16.msra.mxu0 %v509
    %642 = vmatprep.subr.bf16.mxu0 0
    %643 = vmatpush1.bf16.msra.mxu0 %v510
    %644 = vmatprep.subr.bf16.mxu0 0
    %645 = vmatpush1.bf16.msra.mxu0 %v511
    %646 = vmatprep.subr.bf16.mxu0 0
    %647 = vmatpush1.bf16.msra.mxu0 %v512
    %648 = vmatprep.subr.bf16.mxu0 0
    %649 = vmatpush1.bf16.msra.mxu0 %v513
    %650 = vmatprep.subr.bf16.mxu0 0
    %651 = vmatpush1.bf16.msra.mxu0 %v514
    %652 = vmatprep.subr.bf16.mxu0 0
    %653 = vmatpush1.bf16.msra.mxu0 %v515
    %654 = vmatprep.subr.bf16.mxu0 0
    %655 = vmatpush1.bf16.msra.mxu0 %v516
    %656 = vmatprep.subr.bf16.mxu0 0
    %657 = vmatpush1.bf16.msra.mxu0 %v517
    %658 = vmatprep.subr.bf16.mxu0 0
    %659 = vmatpush1.bf16.msra.mxu0 %v518
    %660 = vmatprep.subr.bf16.mxu0 0
    %661 = vmatpush1.bf16.msra.mxu0 %v519
    %662 = vmatprep.subr.bf16.mxu0 0
    %663 = vmatpush1.bf16.msra.mxu0 %v520
    %664 = vmatprep.subr.bf16.mxu0 0
    %665 = vmatpush1.bf16.msra.mxu0 %v521
    %666 = vmatprep.mubr.bf16.mxu0 %v235
    %667 = vmatmul.mubr.bf16.gmra.mrb[0].mxu0 %v234
    %v668 = vpop.f32.mrb[0].mxu0
    %v669 = vadd.f32 0.0, %v668
    %v670 = vpop.f32.mrb[0].mxu0
    %v671 = vpop.f32.mrb[0].mxu0
    %v672 = vpop.f32.mrb[0].mxu0
    %673 = vdwg.mxu0
    %674 = vmatprep.subr.bf16.mxu0 0
    %675 = vmatpush1.bf16.msra.mxu0 %v522
    %676 = vmatprep.subr.bf16.mxu0 0
    %677 = vmatpush1.bf16.msra.mxu0 %v523
    %678 = vmatprep.subr.bf16.mxu0 0
    %679 = vmatpush1.bf16.msra.mxu0 %v524
    %680 = vmatprep.subr.bf16.mxu0 0
    %681 = vmatpush1.bf16.msra.mxu0 %v525
    %682 = vmatprep.subr.bf16.mxu0 0
    %683 = vmatpush1.bf16.msra.mxu0 %v526
    %684 = vmatprep.subr.bf16.mxu0 0
    %685 = vmatpush1.bf16.msra.mxu0 %v527
    %686 = vmatprep.subr.bf16.mxu0 0
    %687 = vmatpush1.bf16.msra.mxu0 %v528
    %688 = vmatprep.subr.bf16.mxu0 0
    %689 = vmatpush1.bf16.msra.mxu0 %v529
    %690 = vmatprep.subr.bf16.mxu0 0
    %691 = vmatpush1.bf16.msra.mxu0 %v530
    %692 = vmatprep.subr.bf16.mxu0 0
    %693 = vmatpush1.bf16.msra.mxu0 %v531
    %694 = vmatprep.subr.bf16.mxu0 0
    %695 = vmatpush1.bf16.msra.mxu0 %v532
    %696 = vmatprep.subr.bf16.mxu0 0
    %697 = vmatpush1.bf16.msra.mxu0 %v533
    %698 = vmatprep.subr.bf16.mxu0 0
    %699 = vmatpush1.bf16.msra.mxu0 %v534
    %700 = vmatprep.subr.bf16.mxu0 0
    %701 = vmatpush1.bf16.msra.mxu0 %v535
    %702 = vmatprep.subr.bf16.mxu0 0
    %703 = vmatpush1.bf16.msra.mxu0 %v536
    %704 = vmatprep.subr.bf16.mxu0 0
    %705 = vmatpush1.bf16.msra.mxu0 %v537
    %706 = vmatprep.mubr.bf16.mxu0 %v237
    %707 = vmatmul.mubr.bf16.gmra.mrb[0].mxu0 %v236
    %v708 = vpop.f32.mrb[0].mxu0
    %v709 = vadd.f32 %v669, %v708
    %v710 = vpop.f32.mrb[0].mxu0
    %v711 = vpop.f32.mrb[0].mxu0
    %v712 = vpop.f32.mrb[0].mxu0
    %713 = vdwg.mxu0
    %714 = vmatprep.subr.bf16.mxu0 0
    %715 = vmatpush1.bf16.msra.mxu0 %v538
    %716 = vmatprep.subr.bf16.mxu0 0
    %717 = vmatpush1.bf16.msra.mxu0 %v539
    %718 = vmatprep.subr.bf16.mxu0 0
    %719 = vmatpush1.bf16.msra.mxu0 %v540
    %720 = vmatprep.subr.bf16.mxu0 0
    %721 = vmatpush1.bf16.msra.mxu0 %v541
    %722 = vmatprep.subr.bf16.mxu0 0
    %723 = vmatpush1.bf16.msra.mxu0 %v542
    %724 = vmatprep.subr.bf16.mxu0 0
    %725 = vmatpush1.bf16.msra.mxu0 %v543
    %726 = vmatprep.subr.bf16.mxu0 0
    %727 = vmatpush1.bf16.msra.mxu0 %v544
    %728 = vmatprep.subr.bf16.mxu0 0
    %729 = vmatpush1.bf16.msra.mxu0 %v545
    %730 = vmatprep.subr.bf16.mxu0 0
    %731 = vmatpush1.bf16.msra.mxu0 %v546
    %732 = vmatprep.subr.bf16.mxu0 0
    %733 = vmatpush1.bf16.msra.mxu0 %v547
    %734 = vmatprep.subr.bf16.mxu0 0
    %735 = vmatpush1.bf16.msra.mxu0 %v548
    %736 = vmatprep.subr.bf16.mxu0 0
    %737 = vmatpush1.bf16.msra.mxu0 %v549
    %738 = vmatprep.subr.bf16.mxu0 0
    %739 = vmatpush1.bf16.msra.mxu0 %v550
    %740 = vmatprep.subr.bf16.mxu0 0
    %741 = vmatpush1.bf16.msra.mxu0 %v551
    %742 = vmatprep.subr.bf16.mxu0 0
    %743 = vmatpush1.bf16.msra.mxu0 %v552
    %744 = vmatprep.subr.bf16.mxu0 0
    %745 = vmatpush1.bf16.msra.mxu0 %v553
    %746 = vmatprep.mubr.bf16.mxu0 %v239
    %747 = vmatmul.mubr.bf16.gmra.mrb[0].mxu0 %v238
    %v748 = vpop.f32.mrb[0].mxu0
    %v749 = vadd.f32 %v709, %v748
    %v750 = vpop.f32.mrb[0].mxu0
    %v751 = vpop.f32.mrb[0].mxu0
    %v752 = vpop.f32.mrb[0].mxu0
    %753 = vdwg.mxu0
    %754 = vmatprep.subr.bf16.mxu0 0
    %755 = vmatpush1.bf16.msra.mxu0 %v554
    %756 = vmatprep.subr.bf16.mxu0 0
    %757 = vmatpush1.bf16.msra.mxu0 %v555
    %758 = vmatprep.subr.bf16.mxu0 0
    %759 = vmatpush1.bf16.msra.mxu0 %v556
    %760 = vmatprep.subr.bf16.mxu0 0
    %761 = vmatpush1.bf16.msra.mxu0 %v557
    %762 = vmatprep.subr.bf16.mxu0 0
    %763 = vmatpush1.bf16.msra.mxu0 %v558
    %764 = vmatprep.subr.bf16.mxu0 0
    %765 = vmatpush1.bf16.msra.mxu0 %v559
    %766 = vmatprep.subr.bf16.mxu0 0
    %767 = vmatpush1.bf16.msra.mxu0 %v560
    %768 = vmatprep.subr.bf16.mxu0 0
    %769 = vmatpush1.bf16.msra.mxu0 %v561
    %770 = vmatprep.subr.bf16.mxu0 0
    %771 = vmatpush1.bf16.msra.mxu0 %v562
    %772 = vmatprep.subr.bf16.mxu0 0
    %773 = vmatpush1.bf16.msra.mxu0 %v563
    %774 = vmatprep.subr.bf16.mxu0 0
    %775 = vmatpush1.bf16.msra.mxu0 %v564
    %776 = vmatprep.subr.bf16.mxu0 0
    %777 = vmatpush1.bf16.msra.mxu0 %v565
    %778 = vmatprep.subr.bf16.mxu0 0
    %779 = vmatpush1.bf16.msra.mxu0 %v566
    %780 = vmatprep.subr.bf16.mxu0 0
    %781 = vmatpush1.bf16.msra.mxu0 %v567
    %782 = vmatprep.subr.bf16.mxu0 0
    %783 = vmatpush1.bf16.msra.mxu0 %v568
    %784 = vmatprep.subr.bf16.mxu0 0
    %785 = vmatpush1.bf16.msra.mxu0 %v569
    %786 = vmatprep.mubr.bf16.mxu0 %v241
    %787 = vmatmul.mubr.bf16.gmra.mrb[0].mxu0 %v240
    %v788 = vpop.f32.mrb[0].mxu0
    %v789 = vadd.f32 %v749, %v788
    %v790 = vpop.f32.mrb[0].mxu0
    %v791 = vpop.f32.mrb[0].mxu0
    %v792 = vpop.f32.mrb[0].mxu0
    %793 = vdwg.mxu0
    %v794 = vadd.f32 %v89, %v789
    %795 = vst [vmem:[#allocation13] sm:$0xff] %v794
    // Predicated region
    $region50: #{tpu_custom_call.1} parent=1 // pred_check
      %p796 = pneg %p61
    $region51: #{tpu_custom_call.1} parent=1 // pred_check_branch
      %798 = sbr.rel (%p796) target = $region53
    $region52: #{tpu_custom_call.1} parent=1 // pred_region
      %v799 = vld [vmem:[#allocation13] sm:$0xff]
      %v800 = vld [vmem:[%s3] sm:$0x1]
      %v802 = vlaneseq
      %v803 = vshrl.u32 %v802, 7
      %v804 = vsub.s32 0, %v803
      %v805 = vrot.slane %v800, %v804
      %v807 = vadd.f32 %v799, %v805
      %v808 = vmax.f32 %v807, 0.0
      %809 = vst [vmem:[#allocation13] sm:$0xff] %v808
      %s810 = smul.u32 4, 16
      %s811 = smul.u32 %s810, 1
      %s812 = sshll.u32 %s811, 4
      %813 = dma.done [#allocation4], %s812
      %s814 = scalar_lea.sflag [#allocation4], 1
      %s815 = sshll.u32 %s811, 4
      %816 = dma.done %s814, %s815
      %v817 = vpack.c.bf16 %v808, %v808
      %v818 = vld [vmem:[#allocation2] sm:$0xff]
      %v819 = vld [vmem:[#allocation2 + $0x8] sm:$0xff]
      %v820 = vld [vmem:[#allocation2 + $0x10] sm:$0xff]
      %v821 = vld [vmem:[#allocation2 + $0x18] sm:$0xff]
      %v822 = vld [vmem:[#allocation2 + $0x20] sm:$0xff]
      %v823 = vld [vmem:[#allocation2 + $0x28] sm:$0xff]
      %v824 = vld [vmem:[#allocation2 + $0x30] sm:$0xff]
      %v825 = vld [vmem:[#allocation2 + $0x38] sm:$0xff]
      %v826 = vld [vmem:[%s4] sm:$0x1]
      %v828 = vlaneseq
      %v829 = vshrl.u32 %v828, 7
      %v830 = vsub.s32 0, %v829
      %v831 = vrot.slane %v826, %v830
      %833 = vmatprep.subr.bf16.mxu0 0
      %834 = vmatpush1.bf16.msra.mxu0 %v818
      %835 = vmatprep.subr.bf16.mxu0 0
      %836 = vmatpush1.bf16.msra.mxu0 %v819
      %837 = vmatprep.subr.bf16.mxu0 0
      %838 = vmatpush1.bf16.msra.mxu0 %v820
      %839 = vmatprep.subr.bf16.mxu0 0
      %840 = vmatpush1.bf16.msra.mxu0 %v821
      %841 = vmatprep.subr.bf16.mxu0 0
      %842 = vmatpush1.bf16.msra.mxu0 %v822
      %843 = vmatprep.subr.bf16.mxu0 0
      %844 = vmatpush1.bf16.msra.mxu0 %v823
      %845 = vmatprep.subr.bf16.mxu0 0
      %846 = vmatpush1.bf16.msra.mxu0 %v824
      %847 = vmatprep.subr.bf16.mxu0 0
      %848 = vmatpush1.bf16.msra.mxu0 %v825
      %849 = vmatprep.subr.bf16.mxu0 0
      %850 = vmatpush1.bf16.msra.mxu0 0
      %851 = vmatprep.subr.bf16.mxu0 0
      %852 = vmatpush1.bf16.msra.mxu0 0
      %853 = vmatprep.subr.bf16.mxu0 0
      %854 = vmatpush1.bf16.msra.mxu0 0
      %855 = vmatprep.subr.bf16.mxu0 0
      %856 = vmatpush1.bf16.msra.mxu0 0
      %857 = vmatprep.subr.bf16.mxu0 0
      %858 = vmatpush1.bf16.msra.mxu0 0
      %859 = vmatprep.subr.bf16.mxu0 0
      %860 = vmatpush1.bf16.msra.mxu0 0
      %861 = vmatprep.subr.bf16.mxu0 0
      %862 = vmatpush1.bf16.msra.mxu0 0
      %863 = vmatprep.subr.bf16.mxu0 0
      %864 = vmatpush1.bf16.msra.mxu0 0
      %865 = vmatprep.mubr.bf16.mxu0 0
      %866 = vmatmul.mubr.bf16.gmra.mrb[0].mxu0 %v817
      %v867 = vpop.f32.mrb[0].mxu0
      %v868 = vadd.f32 %v831, %v867
      %v869 = vpop.f32.mrb[0].mxu0
      %v870 = vpop.f32.mrb[0].mxu0
      %v871 = vpop.f32.mrb[0].mxu0
      %872 = vdwg.mxu0
      %s873 = sld [smem:[#allocation6]]
      %v874 = vlaneseq
      %v875 = vshrl.u32 %v874, 7
      %v876 = vstv %s873
      %vm877 = vcmp.lt.s32.totalorder %v875, %v876
      %s878 = scvt.s32.f32 %s873
      %v879 = vstv %s878
      %v880 = vrcp.pop %v879
      %s881 = vtos %v880
      %v882 = vsel %vm877, %v868, 0.0
      %v883 = vrot.slane %v882, 4
      %v884 = vadd.f32 %v882, %v883
      %v885 = vrot.slane %v884, 2
      %v886 = vadd.f32 %v884, %v885
      %v887 = vrot.slane %v886, 1
      %v888 = vadd.f32 %v886, %v887
      %v889 = vstv %s881
      %v890 = vmul.f32 %v888, %v889
      %v891 = vsub.f32 %v868, %v890
      %v892 = vsel %vm877, %v891, 0.0
      %v893 = vmul.f32 %v892, %v892
      %v894 = vrot.slane %v893, 4
      %v895 = vadd.f32 %v893, %v894
      %v896 = vrot.slane %v895, 2
      %v897 = vadd.f32 %v895, %v896
      %v898 = vrot.slane %v897, 1
      %v899 = vadd.f32 %v897, %v898
      %v900 = vmul.f32 %v899, %v889
      %v901 = vadd.f32 %v900, 1e-05
      %v902 = vrsqrt.pop %v901
      %v903 = vmul.f32 %v891, %v902
      %v904 = vld [vmem:[%s5] sm:$0x1]
      %v906 = vlaneseq
      %v907 = vshrl.u32 %v906, 7
      %v908 = vsub.s32 0, %v907
      %v909 = vrot.slane %v904, %v908
      %v911 = vmul.f32 %v903, %v909
      %v912 = vld [vmem:[%s6] sm:$0x1]
      %v914 = vlaneseq
      %v915 = vshrl.u32 %v914, 7
      %v916 = vsub.s32 0, %v915
      %v917 = vrot.slane %v912, %v916
      %v919 = vadd.f32 %v911, %v917
      %v920 = vmax.f32 %v919, 0.0
      %v921 = vpack.c.bf16 %v920, %v920
      %v922 = vld [vmem:[#allocation3] sm:$0xff]
      %v923 = vld [vmem:[#allocation3 + $0x8] sm:$0xff]
      %v924 = vld [vmem:[#allocation3 + $0x10] sm:$0xff]
      %v925 = vld [vmem:[#allocation3 + $0x18] sm:$0xff]
      %v926 = vld [vmem:[#allocation3 + $0x20] sm:$0xff]
      %v927 = vld [vmem:[#allocation3 + $0x28] sm:$0xff]
      %v928 = vld [vmem:[#allocation3 + $0x30] sm:$0xff]
      %v929 = vld [vmem:[#allocation3 + $0x38] sm:$0xff]
      %v930 = vld [vmem:[%s7] sm:$0x1]
      %v932 = vlaneseq
      %v933 = vshrl.u32 %v932, 7
      %v934 = vsub.s32 0, %v933
      %v935 = vrot.slane %v930, %v934
      %937 = vmatprep.subr.bf16.mxu0 0
      %938 = vmatpush1.bf16.msra.mxu0 %v922
      %939 = vmatprep.subr.bf16.mxu0 0
      %940 = vmatpush1.bf16.msra.mxu0 %v923
      %941 = vmatprep.subr.bf16.mxu0 0
      %942 = vmatpush1.bf16.msra.mxu0 %v924
      %943 = vmatprep.subr.bf16.mxu0 0
      %944 = vmatpush1.bf16.msra.mxu0 %v925
      %945 = vmatprep.subr.bf16.mxu0 0
      %946 = vmatpush1.bf16.msra.mxu0 %v926
      %947 = vmatprep.subr.bf16.mxu0 0
      %948 = vmatpush1.bf16.msra.mxu0 %v927
      %949 = vmatprep.subr.bf16.mxu0 0
      %950 = vmatpush1.bf16.msra.mxu0 %v928
      %951 = vmatprep.subr.bf16.mxu0 0
      %952 = vmatpush1.bf16.msra.mxu0 %v929
      %953 = vmatprep.subr.bf16.mxu0 0
      %954 = vmatpush1.bf16.msra.mxu0 0
      %955 = vmatprep.subr.bf16.mxu0 0
      %956 = vmatpush1.bf16.msra.mxu0 0
      %957 = vmatprep.subr.bf16.mxu0 0
      %958 = vmatpush1.bf16.msra.mxu0 0
      %959 = vmatprep.subr.bf16.mxu0 0
      %960 = vmatpush1.bf16.msra.mxu0 0
      %961 = vmatprep.subr.bf16.mxu0 0
      %962 = vmatpush1.bf16.msra.mxu0 0
      %963 = vmatprep.subr.bf16.mxu0 0
      %964 = vmatpush1.bf16.msra.mxu0 0
      %965 = vmatprep.subr.bf16.mxu0 0
      %966 = vmatpush1.bf16.msra.mxu0 0
      %967 = vmatprep.subr.bf16.mxu0 0
      %968 = vmatpush1.bf16.msra.mxu0 0
      %969 = vmatprep.mubr.bf16.mxu0 0
      %970 = vmatmul.mubr.bf16.gmra.mrb[0].mxu0 %v921
      %v971 = vpop.f32.mrb[0].mxu0
      %v972 = vadd.f32 %v935, %v971
      %v973 = vpop.f32.mrb[0].mxu0
      %v974 = vpop.f32.mrb[0].mxu0
      %v975 = vpop.f32.mrb[0].mxu0
      %976 = vdwg.mxu0
      %977 = vst [vmem:[#allocation12] sm:$0xff] %v972
    $region53: #{tpu_custom_call.1} parent=1 // pred_fallthru
      _
    // Predicated region
    $region54: #{tpu_custom_call.1} parent=1 // pred_check
      _
    $region55: #{tpu_custom_call.1} parent=1 // pred_check_branch
      %979 = sbr.rel (0) target = $region57
    $region56: #{tpu_custom_call.1} parent=1 // pred_region
      %s981 = ssub.s32 128, 128
      %982 = vsyncadd [#allocation9], %s981
      %s984 = sshll.u32 [#allocation12], 4
      %s985 = int_to_ptr.vmem [resolvable:$true] %s984
      %987 = dma.vmem_to_hbm [thread:$0]  %s985, 128, %s10, [#allocation9]
    $region57: #{tpu_custom_call.1} parent=1 // pred_fallthru
      _
    // Predicated region
    $region58: #{tpu_custom_call.1} parent=1 // pred_check
      _
    $region59: #{tpu_custom_call.1} parent=1 // pred_check_branch
      %989 = sbr.rel (0) target = $region61
    $region60: #{tpu_custom_call.1} parent=1 // pred_region
      %s991 = ssub.s32 128, 128
      %992 = vsyncadd [#allocation14], %s991
      %s994 = sshll.u32 [#allocation13], 4
      %s995 = int_to_ptr.vmem [resolvable:$true] %s994
      %997 = dma.vmem_to_hbm [thread:$0]  %s995, 128, %s11, [#allocation14]
    $region61: #{tpu_custom_call.1} parent=1 // pred_fallthru
      _
    // Predicated region
    $region62: #{tpu_custom_call.1} parent=1 // pred_check
      _
    $region63: #{tpu_custom_call.1} parent=1 // pred_check_branch
      %999 = sbr.rel (0) target = $region65
    $region64: #{tpu_custom_call.1} parent=1 // pred_region
      %1000 = dma.done [#allocation9], 128
    $region65: #{tpu_custom_call.1} parent=1 // pred_fallthru
      _
    // Predicated region
    $region66: #{tpu_custom_call.1} parent=1 // pred_check
      _
    $region67: #{tpu_custom_call.1} parent=1 // pred_check_branch
      %1002 = sbr.rel (0) target = $region69
    $region68: #{tpu_custom_call.1} parent=1 // pred_region
      %1003 = dma.done [#allocation14], 128
    $region69: #{tpu_custom_call.1} parent=1 // pred_fallthru
      _
    %1004 = vsyncpa [#allocation8], 1
    %1005 = vsyncpa [#allocation11], 1
    %1006 = vsyncpa [#allocation9], 1
    %1007 = vsyncpa [#allocation14], 1
  %1008 = vsyncmov [#allocation4]
  %s1009 = vpop.sfrf %1008
  %p1010 = scmp.eq.s32.totalorder %s1009, 0
  %p1011 = pneg %p1010
  %1013 = shalt.err (%p1011)
  %s1014 = scalar_lea.sflag [#allocation4], 1
  %1015 = vsyncmov %s1014
  %s1016 = vpop.sfrf %1015
  %p1017 = scmp.eq.s32.totalorder %s1016, 0
  %p1018 = pneg %p1017
  %1020 = shalt.err (%p1018)

</llo_original>
